<compile_context>
chip_gen: v5e
topology: v5e:2x2
jax: 0.10.0
libtpu: 0.0.40
codegen_flags: <defaults>
</compile_context>

<pallas_src>
import jax
import jax.numpy as jnp
from jax.experimental import pallas as pl
from jax.experimental.pallas import tpu as pltpu

IN_DIM = 28 * 28            # 784 (= 49*16, sublane-aligned for bf16 — no K padding)
H1 = 256
H2 = 128
OUT_DIM = 10
OUT_PAD = 128               # lane-dense fc3 output; padded columns are zero and sliced off


def _mlp_kernel(x_ref, w1_ref, b1_ref, w2_ref, b2_ref, w3_ref, b3_ref, o_ref):
    """One batch tile: fc1+ReLU -> fc2+ReLU -> fc3 (dropout = identity in eval mode)."""
    # x arrives as f32 (single HBM read); the bf16 cast runs on the VPU and
    # hides under the DMA / MXU work.
    x = x_ref[...].astype(jnp.bfloat16)
    h1 = jnp.dot(x, w1_ref[...], preferred_element_type=jnp.float32)
    h1 = jnp.maximum(h1 + b1_ref[...], 0.0)
    h2 = jnp.dot(h1.astype(jnp.bfloat16), w2_ref[...],
                 preferred_element_type=jnp.float32)
    h2 = jnp.maximum(h2 + b2_ref[...], 0.0)
    # fc3: output padded to 128 lanes; padded w3/b3 columns are exactly zero.
    o = jnp.dot(h2.astype(jnp.bfloat16), w3_ref[...],
                preferred_element_type=jnp.float32)
    o_ref[...] = (o + b3_ref[...]).astype(o_ref.dtype)


def _grid_shape(batch: int):
    """Return (tile, steps) for the batch axis.

    * B <= 512: one grid step covering the whole batch (v5e/v6e have a single
      TensorCore, so extra steps are pure per-step overhead).
    * B  > 512: ~512-row tiles, with the step count rounded up to an even
      number (v7x shards the 'parallel' axis across 2 TCs) and the tile sized
      down so batch padding stays minimal.
    """
    if batch <= 512:
        tile = max(8, pl.cdiv(batch, 8) * 8)
        return tile, 1
    steps = pl.cdiv(batch, 512)
    if steps % 2:
        steps += 1
    tile = pl.cdiv(pl.cdiv(batch, steps), 8) * 8
    return tile, steps


def prepare_params(w1, b1, w2, b2, w3, b3):
    """One-time parameter prep (hoisted out of the per-call hot path).

    * weights -> bf16 for the MXU (f32 accumulation happens in-kernel),
    * fc3 output dim zero-padded 10 -> 128 (lane-dense stores),
    * biases kept in f32 (added to the f32 accumulators).
    """
    w1c = w1.astype(jnp.bfloat16)                       # (784, 256)
    w2c = w2.astype(jnp.bfloat16)                       # (256, 128)
    w3p = (jnp.zeros((H2, OUT_PAD), jnp.float32).at[:, :OUT_DIM].set(w3)
           .astype(jnp.bfloat16))                       # (128, 128), pad cols == 0
    b1r = b1.reshape(1, H1).astype(jnp.float32)
    b2r = b2.reshape(1, H2).astype(jnp.float32)
    b3p = jnp.zeros((1, OUT_PAD), jnp.float32).at[:, :OUT_DIM].set(b3)
    return w1c, b1r, w2c, b2r, w3p, b3p


@jax.jit
def net_forward(x_nchw, w1c, b1r, w2c, b2r, w3p, b3p):
    """x_nchw: (B, 1, 28, 28) float32 -> logits (B, 10) float32."""
    B = x_nchw.shape[0]
    tile, steps = _grid_shape(B)
    b_pad = tile * steps

    # == torch x.view(-1, 784): metadata-only reshape; x stays f32 in HBM and
    # is cast to bf16 inside the kernel (single read, no staged copy).
    x = x_nchw.reshape(B, IN_DIM)
    if b_pad != B:
        x = jnp.pad(x, ((0, b_pad - B), (0, 0)))

    # Weights/biases never change across the grid -> single-buffer them so the
    # pipeline doesn't allocate a dead duplicate VMEM copy. x / output keep the
    # default double-buffering.
    def const(shape):
        return pl.BlockSpec(shape, lambda i: (0, 0),
                            pipeline_mode=pl.Buffered(buffer_count=1))

    out = pl.pallas_call(
        _mlp_kernel,
        out_shape=jax.ShapeDtypeStruct((b_pad, OUT_PAD), jnp.float32),
        grid_spec=pltpu.PrefetchScalarGridSpec(
            num_scalar_prefetch=0,
            grid=(steps,),
            in_specs=[
                pl.BlockSpec((tile, IN_DIM), lambda i: (i, 0)),  # x tile (f32, streamed)
                const((IN_DIM, H1)),    # w1 (bf16)
                const((1, H1)),         # b1 (f32)
                const((H1, H2)),        # w2 (bf16)
                const((1, H2)),         # b2 (f32)
                const((H2, OUT_PAD)),   # w3 (bf16, padded)
                const((1, OUT_PAD)),    # b3 (f32, padded)
            ],
            out_specs=pl.BlockSpec((tile, OUT_PAD), lambda i: (i, 0)),
        ),
        compiler_params=pltpu.CompilerParams(
            dimension_semantics=("parallel",),
            # v5e's scoped-VMEM default is 16 MiB; 512-row f32 x tiles plus
            # intermediates want explicit headroom. 32 MiB fits every chip.
            vmem_limit_bytes=32 * 1024 * 1024,
        ),
    )(x, w1c, b1r, w2c, b2r, w3p, b3p)

    return out[:B, :OUT_DIM]


def init_params(key):
    """Deterministic init mimicking torch.nn.Linear default (U[-1/sqrt(fan_in), +])."""
    ks = jax.random.split(key, 6)

    def linear(kw, kb, fan_in, fan_out):
        bound = 1.0 / jnp.sqrt(jnp.float32(fan_in))
        w = jax.random.uniform(kw, (fan_in, fan_out), jnp.float32, -bound, bound)
        b = jax.random.uniform(kb, (fan_out,), jnp.float32, -bound, bound)
        return w, b

    w1, b1 = linear(ks[0], ks[1], IN_DIM, H1)
    w2, b2 = linear(ks[2], ks[3], H1, H2)
    w3, b3 = linear(ks[4], ks[5], H2, OUT_DIM)
    return w1, b1, w2, b2, w3, b3


if __name__ == "__main__":
    key = jax.random.PRNGKey(0)
    k_x, k_p = jax.random.split(key)

    params = init_params(k_p)
    prepped = prepare_params(*params)      # one-time prep, outside the hot path
    w1, b1, w2, b2, w3, b3 = params

    def ref_f32(xb):
        xr = xb.reshape(-1, IN_DIM)
        h1 = jnp.maximum(xr @ w1 + b1, 0.0)
        h2 = jnp.maximum(h1 @ w2 + b2, 0.0)
        return h2 @ w3 + b3

    def ref_bf16(xb):
        q = lambda a: a.astype(jnp.bfloat16).astype(jnp.float32)
        xr = q(xb.reshape(-1, IN_DIM))
        h1 = q(jnp.maximum(xr @ q(w1) + b1, 0.0))
        h2 = q(jnp.maximum(h1 @ q(w2) + b2, 0.0))
        return h2 @ q(w3) + b3

    # Small demo batch: single grid step, no batch padding.
    B = 8
    x = jax.random.normal(k_x, (B, 1, 28, 28), jnp.float32)   # NCHW, like MNIST
    logits = net_forward(x, *prepped)
    jax.block_until_ready(logits)
    assert logits.shape == (B, OUT_DIM)
    # Tight check vs. the same bf16 quantization the kernel uses.
    assert jnp.max(jnp.abs(logits - ref_bf16(x))) < 2e-2
    # Loose check vs. the full-f32 torch-semantics forward.
    assert jnp.max(jnp.abs(logits - ref_f32(x))) < 1e-1

    # Larger batch: exercises the multi-step (even grid) + batch-padding path.
    B2 = 616
    x2 = jax.random.normal(k_x, (B2, 1, 28, 28), jnp.float32)
    logits2 = net_forward(x2, *prepped)
    jax.block_until_ready(logits2)
    assert logits2.shape == (B2, OUT_DIM)
    assert jnp.max(jnp.abs(logits2 - ref_bf16(x2))) < 2e-2

    print("KERNEL_OK")
</pallas_src>

<mosaic_0001>
module attributes {stable_mosaic.version = 11 : i64} {
  func.func @_mlp_kernel(%arg0: i32, %arg1: memref<8x784xf32, #tpu.memory_space<vmem>>, %arg2: memref<784x256xbf16, #tpu.memory_space<vmem>>, %arg3: memref<1x256xf32, #tpu.memory_space<vmem>>, %arg4: memref<256x128xbf16, #tpu.memory_space<vmem>>, %arg5: memref<1x128xf32, #tpu.memory_space<vmem>>, %arg6: memref<128x128xbf16, #tpu.memory_space<vmem>>, %arg7: memref<1x128xf32, #tpu.memory_space<vmem>>, %arg8: memref<8x128xf32, #tpu.memory_space<vmem>>) attributes {dimension_semantics = [#tpu.dimension_semantics<parallel>], iteration_bounds = array<i64: 1>, scalar_prefetch = 0 : i64, scratch_operands = 0 : i64, tpu.core_type = #tpu.core_type<tc>, window_params = [{transform_indices = @transform_0, window_bounds = array<i64: 8, 784>}, {pipeline_mode = #tpu.pipeline_mode<synchronous>, transform_indices = @transform_1, window_bounds = array<i64: 784, 256>}, {pipeline_mode = #tpu.pipeline_mode<synchronous>, transform_indices = @transform_2, window_bounds = array<i64: 1, 256>}, {pipeline_mode = #tpu.pipeline_mode<synchronous>, transform_indices = @transform_3, window_bounds = array<i64: 256, 128>}, {pipeline_mode = #tpu.pipeline_mode<synchronous>, transform_indices = @transform_4, window_bounds = array<i64: 1, 128>}, {pipeline_mode = #tpu.pipeline_mode<synchronous>, transform_indices = @transform_5, window_bounds = array<i64: 128, 128>}, {pipeline_mode = #tpu.pipeline_mode<synchronous>, transform_indices = @transform_6, window_bounds = array<i64: 1, 128>}, {transform_indices = @transform_7, window_bounds = array<i64: 8, 128>}]} {
    %c0 = arith.constant 0 : index
    %c0_0 = arith.constant 0 : index
    %0 = vector.load %arg1[%c0, %c0_0] : memref<8x784xf32, #tpu.memory_space<vmem>>, vector<8x784xf32>
    %1 = arith.truncf %0 : vector<8x784xf32> to vector<8x784xbf16>
    %c0_1 = arith.constant 0 : index
    %c0_2 = arith.constant 0 : index
    %2 = vector.load %arg2[%c0_1, %c0_2] : memref<784x256xbf16, #tpu.memory_space<vmem>>, vector<784x256xbf16>
    %cst = arith.constant dense<0.000000e+00> : vector<8x256xf32>
    %3 = tpu.matmul %1, %2, %cst {dimension_numbers = #tpu.dot_dimension_numbers<[1], [0], [0], [1], [0, 0, 1, 1], [], []>} : vector<8x784xbf16>, vector<784x256xbf16>, vector<8x256xf32> -> vector<8x256xf32>
    %c0_3 = arith.constant 0 : index
    %c0_4 = arith.constant 0 : index
    %4 = vector.load %arg3[%c0_3, %c0_4] : memref<1x256xf32, #tpu.memory_space<vmem>>, vector<1x256xf32>
    %5 = vector.broadcast %4 : vector<1x256xf32> to vector<8x256xf32>
    %6 = arith.addf %3, %5 : vector<8x256xf32>
    %cst_5 = arith.constant 0.000000e+00 : f32
    %7 = vector.broadcast %cst_5 : f32 to vector<8x256xf32>
    %8 = arith.maximumf %6, %7 : vector<8x256xf32>
    %9 = arith.truncf %8 : vector<8x256xf32> to vector<8x256xbf16>
    %c0_6 = arith.constant 0 : index
    %c0_7 = arith.constant 0 : index
    %10 = vector.load %arg4[%c0_6, %c0_7] : memref<256x128xbf16, #tpu.memory_space<vmem>>, vector<256x128xbf16>
    %cst_8 = arith.constant dense<0.000000e+00> : vector<8x128xf32>
    %11 = tpu.matmul %9, %10, %cst_8 {dimension_numbers = #tpu.dot_dimension_numbers<[1], [0], [0], [1], [0, 0, 1, 1], [], []>} : vector<8x256xbf16>, vector<256x128xbf16>, vector<8x128xf32> -> vector<8x128xf32>
    %c0_9 = arith.constant 0 : index
    %c0_10 = arith.constant 0 : index
    %12 = vector.load %arg5[%c0_9, %c0_10] : memref<1x128xf32, #tpu.memory_space<vmem>>, vector<1x128xf32>
    %13 = vector.broadcast %12 : vector<1x128xf32> to vector<8x128xf32>
    %14 = arith.addf %11, %13 : vector<8x128xf32>
    %cst_11 = arith.constant 0.000000e+00 : f32
    %15 = vector.broadcast %cst_11 : f32 to vector<8x128xf32>
    %16 = arith.maximumf %14, %15 : vector<8x128xf32>
    %17 = arith.truncf %16 : vector<8x128xf32> to vector<8x128xbf16>
    %c0_12 = arith.constant 0 : index
    %c0_13 = arith.constant 0 : index
    %18 = vector.load %arg6[%c0_12, %c0_13] : memref<128x128xbf16, #tpu.memory_space<vmem>>, vector<128x128xbf16>
    %cst_14 = arith.constant dense<0.000000e+00> : vector<8x128xf32>
    %19 = tpu.matmul %17, %18, %cst_14 {dimension_numbers = #tpu.dot_dimension_numbers<[1], [0], [0], [1], [0, 0, 1, 1], [], []>} : vector<8x128xbf16>, vector<128x128xbf16>, vector<8x128xf32> -> vector<8x128xf32>
    %c0_15 = arith.constant 0 : index
    %c0_16 = arith.constant 0 : index
    %20 = vector.load %arg7[%c0_15, %c0_16] : memref<1x128xf32, #tpu.memory_space<vmem>>, vector<1x128xf32>
    %21 = vector.broadcast %20 : vector<1x128xf32> to vector<8x128xf32>
    %22 = arith.addf %19, %21 : vector<8x128xf32>
    %c0_17 = arith.constant 0 : index
    %c0_18 = arith.constant 0 : index
    %23 = vector.load %arg8[%c0_17, %c0_18] : memref<8x128xf32, #tpu.memory_space<vmem>>, vector<8x128xf32>
    tpu.vector_store %arg8[%c0_17, %c0_18], %22 {strides = array<i32>} : memref<8x128xf32, #tpu.memory_space<vmem>>, vector<8x128xf32>,
    return
  }
  func.func @transform_0(%arg0: i32) -> (i32, i32) {
    %c0_i32 = arith.constant 0 : i32
    %c0_i32_0 = arith.constant 0 : i32
    return %arg0, %c0_i32 : i32, i32
  }
  func.func @transform_1(%arg0: i32) -> (i32, i32) {
    %c0_i32 = arith.constant 0 : i32
    %c0_i32_0 = arith.constant 0 : i32
    %c0_i32_1 = arith.constant 0 : i32
    return %c0_i32, %c0_i32_0 : i32, i32
  }
  func.func @transform_2(%arg0: i32) -> (i32, i32) {
    %c0_i32 = arith.constant 0 : i32
    %c0_i32_0 = arith.constant 0 : i32
    %c0_i32_1 = arith.constant 0 : i32
    return %c0_i32, %c0_i32_0 : i32, i32
  }
  func.func @transform_3(%arg0: i32) -> (i32, i32) {
    %c0_i32 = arith.constant 0 : i32
    %c0_i32_0 = arith.constant 0 : i32
    %c0_i32_1 = arith.constant 0 : i32
    return %c0_i32, %c0_i32_0 : i32, i32
  }
  func.func @transform_4(%arg0: i32) -> (i32, i32) {
    %c0_i32 = arith.constant 0 : i32
    %c0_i32_0 = arith.constant 0 : i32
    %c0_i32_1 = arith.constant 0 : i32
    return %c0_i32, %c0_i32_0 : i32, i32
  }
  func.func @transform_5(%arg0: i32) -> (i32, i32) {
    %c0_i32 = arith.constant 0 : i32
    %c0_i32_0 = arith.constant 0 : i32
    %c0_i32_1 = arith.constant 0 : i32
    return %c0_i32, %c0_i32_0 : i32, i32
  }
  func.func @transform_6(%arg0: i32) -> (i32, i32) {
    %c0_i32 = arith.constant 0 : i32
    %c0_i32_0 = arith.constant 0 : i32
    %c0_i32_1 = arith.constant 0 : i32
    return %c0_i32, %c0_i32_0 : i32, i32
  }
  func.func @transform_7(%arg0: i32) -> (i32, i32) {
    %c0_i32 = arith.constant 0 : i32
    %c0_i32_0 = arith.constant 0 : i32
    return %arg0, %c0_i32 : i32, i32
  }
}

</mosaic_0001>

<llo_original>
// kernel: net_forward.1
$region0: #{net_forward.1}
  #allocation0 [shape = 'u32[]', space=smem, size = 0x4, offset = 0x4, fixed_abs, tag = 'smem constant byte address 0x4 - core index']
  #allocation1 [shape = 'u32[72,128]{1,0:T(1,128)}', space=vmem, size = 0x9000, scoped, tag = 'internal scratch']
  %s0 = inlined_call_operand.vmem [shape: f32[8,784], index: 0, kind: input, shape index: {}]
  %s1 = inlined_call_operand.vmem [shape: bf16[784,256], index: 1, kind: input, shape index: {}]
  %s2 = inlined_call_operand.vmem [shape: f32[1,256], index: 2, kind: input, shape index: {}]
  %s3 = inlined_call_operand.hbm [shape: bf16[256,128], index: 3, kind: input, shape index: {}]
  %s4 = inlined_call_operand.vmem [shape: f32[1,128], index: 4, kind: input, shape index: {}]
  %s5 = inlined_call_operand.hbm [shape: bf16[128,128], index: 5, kind: input, shape index: {}]
  %s6 = inlined_call_operand.vmem [shape: f32[1,128], index: 6, kind: input, shape index: {}]
  %s7 = inlined_call_operand.hbm [shape: f32[8,128], index: 7, kind: output, shape index: {}]
  %s8 = sld [smem:[#allocation0]]
  $region46: #{net_forward.1} parent=0
    _
  %s10 = ssub.s32 1, %s8
  %s11 = scalar_select 0, %s10, %s8
  $region1: #{net_forward.1} parent=0
    #allocation2 [shape = 'u8[65536]{0}', space=vmem, size = 0x10000, scoped, tag = 'input window, operand 3, single buffered']
    #allocation3 [shape = 's32[1]{0}', space=sflag, size = 0x4, scoped, tag = 'scoped memory for net_forward.1']
    #allocation4 [shape = 's32[1]{0}', space=sflag, size = 0x4, scoped, tag = 'scoped memory for net_forward.1']
    #allocation5 [shape = 'u8[32768]{0}', space=vmem, size = 0x8000, scoped, tag = 'input window, operand 5, single buffered']
    #allocation6 [shape = 's32[1]{0}', space=sflag, size = 0x4, scoped, tag = 'scoped memory for net_forward.1']
    #allocation7 [shape = 'u8[4096]{0}', space=vmem, size = 0x1000, scoped, tag = 'output window, operand 0, single buffered']
    %12 = vsyncpa [#allocation3], 0
    %13 = vsyncpa [#allocation6], 0
    %14 = vsyncpa [#allocation4], 0
    // Predicated region
    $region2: #{net_forward.1} parent=1 // pred_check
      _
    $region3: #{net_forward.1} parent=1 // pred_check_branch
      %16 = sbr.rel (0) target = $region5
    $region4: #{net_forward.1} parent=1 // pred_region
      _
    $region5: #{net_forward.1} parent=1 // pred_fallthru
      _
    // Predicated region
    $region6: #{net_forward.1} parent=1 // pred_check
      _
    $region7: #{net_forward.1} parent=1 // pred_check_branch
      %18 = sbr.rel (0) target = $region9
    $region8: #{net_forward.1} parent=1 // pred_region
      _
    $region9: #{net_forward.1} parent=1 // pred_fallthru
      _
    // Predicated region
    $region10: #{net_forward.1} parent=1 // pred_check
      _
    $region11: #{net_forward.1} parent=1 // pred_check_branch
      %20 = sbr.rel (0) target = $region13
    $region12: #{net_forward.1} parent=1 // pred_region
      _
    $region13: #{net_forward.1} parent=1 // pred_fallthru
      _
    // Predicated region
    $region14: #{net_forward.1} parent=1 // pred_check
      _
    $region15: #{net_forward.1} parent=1 // pred_check_branch
      %22 = sbr.rel (0) target = $region17
    $region16: #{net_forward.1} parent=1 // pred_region
      %24 = vsyncadd [#allocation3], 0
      %s25 = sshll.u32 %s3, 4
      %s26 = int_to_ptr.hbm [resolvable:$true] %s25
      %s27 = sshll.u32 [#allocation2], 4
      %s28 = int_to_ptr.vmem [resolvable:$true] %s27
      %33 = dma.hbm_to_vmem [thread:$0]  %s26, 2048, %s28, [#allocation3], 64, 64, 4
    $region17: #{net_forward.1} parent=1 // pred_fallthru
      _
    // Predicated region
    $region18: #{net_forward.1} parent=1 // pred_check
      _
    $region19: #{net_forward.1} parent=1 // pred_check_branch
      %35 = sbr.rel (0) target = $region21
    $region20: #{net_forward.1} parent=1 // pred_region
      _
    $region21: #{net_forward.1} parent=1 // pred_fallthru
      _
    // Predicated region
    $region22: #{net_forward.1} parent=1 // pred_check
      _
    $region23: #{net_forward.1} parent=1 // pred_check_branch
      %37 = sbr.rel (0) target = $region25
    $region24: #{net_forward.1} parent=1 // pred_region
      %39 = vsyncadd [#allocation6], 0
      %s40 = sshll.u32 %s5, 4
      %s41 = int_to_ptr.hbm [resolvable:$true] %s40
      %s42 = sshll.u32 [#allocation5], 4
      %s43 = int_to_ptr.vmem [resolvable:$true] %s42
      %48 = dma.hbm_to_vmem [thread:$0]  %s41, 1024, %s43, [#allocation6], 64, 64, 4
    $region25: #{net_forward.1} parent=1 // pred_fallthru
      _
    // Predicated region
    $region26: #{net_forward.1} parent=1 // pred_check
      _
    $region27: #{net_forward.1} parent=1 // pred_check_branch
      %50 = sbr.rel (0) target = $region29
    $region28: #{net_forward.1} parent=1 // pred_region
      _
    $region29: #{net_forward.1} parent=1 // pred_fallthru
      _
    // Predicated region
    $region30: #{net_forward.1} parent=1 // pred_check
      _
    $region31: #{net_forward.1} parent=1 // pred_check_branch
      %52 = sbr.rel (0) target = $region33
    $region32: #{net_forward.1} parent=1 // pred_region
      %54 = dma.done [#allocation3], 2048
    $region33: #{net_forward.1} parent=1 // pred_fallthru
      _
    // Predicated region
    $region34: #{net_forward.1} parent=1 // pred_check
      _
    $region35: #{net_forward.1} parent=1 // pred_check_branch
      %56 = sbr.rel (0) target = $region37
    $region36: #{net_forward.1} parent=1 // pred_region
      %58 = dma.done [#allocation6], 1024
    $region37: #{net_forward.1} parent=1 // pred_fallthru
      _
    %v60 = vld [vmem:[%s0] sm:$0xff]
    %v61 = vld [vmem:[%s0 + $0x8] sm:$0xff]
    %v62 = vld [vmem:[%s0 + $0x10] sm:$0xff]
    %v63 = vld [vmem:[%s0 + $0x18] sm:$0xff]
    %v64 = vld [vmem:[%s0 + $0x20] sm:$0xff]
    %v65 = vld [vmem:[%s0 + $0x28] sm:$0xff]
    %v66 = vld [vmem:[%s0 + $0x30] sm:$0xff]
    %v67 = vpack.c.bf16 %v60, %v60
    %v68 = vpack.c.bf16 %v61, %v61
    %v69 = vpack.c.bf16 %v62, %v62
    %v70 = vpack.c.bf16 %v63, %v63
    %v71 = vpack.c.bf16 %v64, %v64
    %v72 = vpack.c.bf16 %v65, %v65
    %v73 = vpack.c.bf16 %v66, %v66
    %v74 = vld [vmem:[%s1] sm:$0xff]
    %v75 = vld [vmem:[%s1 + $0x8] sm:$0xff]
    %v76 = vld [vmem:[%s1 + $0x10] sm:$0xff]
    %v77 = vld [vmem:[%s1 + $0x18] sm:$0xff]
    %v78 = vld [vmem:[%s1 + $0x20] sm:$0xff]
    %v79 = vld [vmem:[%s1 + $0x28] sm:$0xff]
    %v80 = vld [vmem:[%s1 + $0x30] sm:$0xff]
    %v81 = vld [vmem:[%s1 + $0x38] sm:$0xff]
    %v82 = vld [vmem:[%s1 + $0x40] sm:$0xff]
    %v83 = vld [vmem:[%s1 + $0x48] sm:$0xff]
    %v84 = vld [vmem:[%s1 + $0x50] sm:$0xff]
    %v85 = vld [vmem:[%s1 + $0x58] sm:$0xff]
    %v86 = vld [vmem:[%s1 + $0x60] sm:$0xff]
    %v87 = vld [vmem:[%s1 + $0x68] sm:$0xff]
    %v88 = vld [vmem:[%s1 + $0x70] sm:$0xff]
    %v89 = vld [vmem:[%s1 + $0x78] sm:$0xff]
    %v90 = vld [vmem:[%s1 + $0x80] sm:$0xff]
    %v91 = vld [vmem:[%s1 + $0x88] sm:$0xff]
    %v92 = vld [vmem:[%s1 + $0x90] sm:$0xff]
    %v93 = vld [vmem:[%s1 + $0x98] sm:$0xff]
    %v94 = vld [vmem:[%s1 + $0xa0] sm:$0xff]
    %v95 = vld [vmem:[%s1 + $0xa8] sm:$0xff]
    %v96 = vld [vmem:[%s1 + $0xb0] sm:$0xff]
    %v97 = vld [vmem:[%s1 + $0xb8] sm:$0xff]
    %v98 = vld [vmem:[%s1 + $0xc0] sm:$0xff]
    %v99 = vld [vmem:[%s1 + $0xc8] sm:$0xff]
    %v100 = vld [vmem:[%s1 + $0xd0] sm:$0xff]
    %v101 = vld [vmem:[%s1 + $0xd8] sm:$0xff]
    %v102 = vld [vmem:[%s1 + $0xe0] sm:$0xff]
    %v103 = vld [vmem:[%s1 + $0xe8] sm:$0xff]
    %v104 = vld [vmem:[%s1 + $0xf0] sm:$0xff]
    %v105 = vld [vmem:[%s1 + $0xf8] sm:$0xff]
    %v106 = vld [vmem:[%s1 + $0x100] sm:$0xff]
    %v107 = vld [vmem:[%s1 + $0x108] sm:$0xff]
    %v108 = vld [vmem:[%s1 + $0x110] sm:$0xff]
    %v109 = vld [vmem:[%s1 + $0x118] sm:$0xff]
    %v110 = vld [vmem:[%s1 + $0x120] sm:$0xff]
    %v111 = vld [vmem:[%s1 + $0x128] sm:$0xff]
    %v112 = vld [vmem:[%s1 + $0x130] sm:$0xff]
    %v113 = vld [vmem:[%s1 + $0x138] sm:$0xff]
    %v114 = vld [vmem:[%s1 + $0x140] sm:$0xff]
    %v115 = vld [vmem:[%s1 + $0x148] sm:$0xff]
    %v116 = vld [vmem:[%s1 + $0x150] sm:$0xff]
    %v117 = vld [vmem:[%s1 + $0x158] sm:$0xff]
    %v118 = vld [vmem:[%s1 + $0x160] sm:$0xff]
    %v119 = vld [vmem:[%s1 + $0x168] sm:$0xff]
    %v120 = vld [vmem:[%s1 + $0x170] sm:$0xff]
    %v121 = vld [vmem:[%s1 + $0x178] sm:$0xff]
    %v122 = vld [vmem:[%s1 + $0x180] sm:$0xff]
    %v123 = vld [vmem:[%s1 + $0x188] sm:$0xff]
    %v124 = vld [vmem:[%s1 + $0x190] sm:$0xff]
    %v125 = vld [vmem:[%s1 + $0x198] sm:$0xff]
    %v126 = vld [vmem:[%s1 + $0x1a0] sm:$0xff]
    %v127 = vld [vmem:[%s1 + $0x1a8] sm:$0xff]
    %v128 = vld [vmem:[%s1 + $0x1b0] sm:$0xff]
    %v129 = vld [vmem:[%s1 + $0x1b8] sm:$0xff]
    %v130 = vld [vmem:[%s1 + $0x1c0] sm:$0xff]
    %v131 = vld [vmem:[%s1 + $0x1c8] sm:$0xff]
    %v132 = vld [vmem:[%s1 + $0x1d0] sm:$0xff]
    %v133 = vld [vmem:[%s1 + $0x1d8] sm:$0xff]
    %v134 = vld [vmem:[%s1 + $0x1e0] sm:$0xff]
    %v135 = vld [vmem:[%s1 + $0x1e8] sm:$0xff]
    %v136 = vld [vmem:[%s1 + $0x1f0] sm:$0xff]
    %v137 = vld [vmem:[%s1 + $0x1f8] sm:$0xff]
    %v138 = vld [vmem:[%s1 + $0x200] sm:$0xff]
    %v139 = vld [vmem:[%s1 + $0x208] sm:$0xff]
    %v140 = vld [vmem:[%s1 + $0x210] sm:$0xff]
    %v141 = vld [vmem:[%s1 + $0x218] sm:$0xff]
    %v142 = vld [vmem:[%s1 + $0x220] sm:$0xff]
    %v143 = vld [vmem:[%s1 + $0x228] sm:$0xff]
    %v144 = vld [vmem:[%s1 + $0x230] sm:$0xff]
    %v145 = vld [vmem:[%s1 + $0x238] sm:$0xff]
    %v146 = vld [vmem:[%s1 + $0x240] sm:$0xff]
    %v147 = vld [vmem:[%s1 + $0x248] sm:$0xff]
    %v148 = vld [vmem:[%s1 + $0x250] sm:$0xff]
    %v149 = vld [vmem:[%s1 + $0x258] sm:$0xff]
    %v150 = vld [vmem:[%s1 + $0x260] sm:$0xff]
    %v151 = vld [vmem:[%s1 + $0x268] sm:$0xff]
    %v152 = vld [vmem:[%s1 + $0x270] sm:$0xff]
    %v153 = vld [vmem:[%s1 + $0x278] sm:$0xff]
    %v154 = vld [vmem:[%s1 + $0x280] sm:$0xff]
    %v155 = vld [vmem:[%s1 + $0x288] sm:$0xff]
    %v156 = vld [vmem:[%s1 + $0x290] sm:$0xff]
    %v157 = vld [vmem:[%s1 + $0x298] sm:$0xff]
    %v158 = vld [vmem:[%s1 + $0x2a0] sm:$0xff]
    %v159 = vld [vmem:[%s1 + $0x2a8] sm:$0xff]
    %v160 = vld [vmem:[%s1 + $0x2b0] sm:$0xff]
    %v161 = vld [vmem:[%s1 + $0x2b8] sm:$0xff]
    %v162 = vld [vmem:[%s1 + $0x2c0] sm:$0xff]
    %v163 = vld [vmem:[%s1 + $0x2c8] sm:$0xff]
    %v164 = vld [vmem:[%s1 + $0x2d0] sm:$0xff]
    %v165 = vld [vmem:[%s1 + $0x2d8] sm:$0xff]
    %v166 = vld [vmem:[%s1 + $0x2e0] sm:$0xff]
    %v167 = vld [vmem:[%s1 + $0x2e8] sm:$0xff]
    %v168 = vld [vmem:[%s1 + $0x2f0] sm:$0xff]
    %v169 = vld [vmem:[%s1 + $0x2f8] sm:$0xff]
    %v170 = vld [vmem:[%s1 + $0x300] sm:$0xff]
    %v171 = vld [vmem:[%s1 + $0x308] sm:$0xff]
    %v172 = vld [vmem:[%s2] sm:$0x3]
    %v174 = vperm.slane %v172, 0
    %v175 = vperm.slane %v172, 1
    %v276 = vunpack.c.l.b16 %v74
    %v277 = vunpack.c.h.b16 %v74
    %v278 = vunpack.c.l.b16 %v75
    %v279 = vunpack.c.h.b16 %v75
    %v280 = vunpack.c.l.b16 %v76
    %v281 = vunpack.c.h.b16 %v76
    %v282 = vunpack.c.l.b16 %v77
    %v283 = vunpack.c.h.b16 %v77
    %v284 = vunpack.c.l.b16 %v78
    %v285 = vunpack.c.h.b16 %v78
    %v286 = vunpack.c.l.b16 %v79
    %v287 = vunpack.c.h.b16 %v79
    %v288 = vunpack.c.l.b16 %v80
    %v289 = vunpack.c.h.b16 %v80
    %v290 = vunpack.c.l.b16 %v81
    %v291 = vunpack.c.h.b16 %v81
    %v292 = vunpack.c.l.b16 %v82
    %v293 = vunpack.c.h.b16 %v82
    %v294 = vunpack.c.l.b16 %v83
    %v295 = vunpack.c.h.b16 %v83
    %v296 = vunpack.c.l.b16 %v84
    %v297 = vunpack.c.h.b16 %v84
    %v298 = vunpack.c.l.b16 %v85
    %v299 = vunpack.c.h.b16 %v85
    %v300 = vunpack.c.l.b16 %v86
    %v301 = vunpack.c.h.b16 %v86
    %v302 = vunpack.c.l.b16 %v87
    %v303 = vunpack.c.h.b16 %v87
    %v304 = vunpack.c.l.b16 %v88
    %v305 = vunpack.c.h.b16 %v88
    %v306 = vunpack.c.l.b16 %v89
    %v307 = vunpack.c.h.b16 %v89
    %v308 = vunpack.c.l.b16 %v90
    %v309 = vunpack.c.h.b16 %v90
    %v310 = vunpack.c.l.b16 %v91
    %v311 = vunpack.c.h.b16 %v91
    %v312 = vunpack.c.l.b16 %v92
    %v313 = vunpack.c.h.b16 %v92
    %v314 = vunpack.c.l.b16 %v93
    %v315 = vunpack.c.h.b16 %v93
    %v316 = vunpack.c.l.b16 %v94
    %v317 = vunpack.c.h.b16 %v94
    %v318 = vunpack.c.l.b16 %v95
    %v319 = vunpack.c.h.b16 %v95
    %v320 = vunpack.c.l.b16 %v96
    %v321 = vunpack.c.h.b16 %v96
    %v322 = vunpack.c.l.b16 %v97
    %v323 = vunpack.c.h.b16 %v97
    %v324 = vunpack.c.l.b16 %v98
    %v325 = vunpack.c.h.b16 %v98
    %v326 = vunpack.c.l.b16 %v99
    %v327 = vunpack.c.h.b16 %v99
    %v328 = vunpack.c.l.b16 %v100
    %v329 = vunpack.c.h.b16 %v100
    %v330 = vunpack.c.l.b16 %v101
    %v331 = vunpack.c.h.b16 %v101
    %v332 = vunpack.c.l.b16 %v102
    %v333 = vunpack.c.h.b16 %v102
    %v334 = vunpack.c.l.b16 %v103
    %v335 = vunpack.c.h.b16 %v103
    %v336 = vunpack.c.l.b16 %v104
    %v337 = vunpack.c.h.b16 %v104
    %v338 = vunpack.c.l.b16 %v105
    %v339 = vunpack.c.h.b16 %v105
    %v340 = vunpack.c.l.b16 %v106
    %v341 = vunpack.c.h.b16 %v106
    %v342 = vunpack.c.l.b16 %v107
    %v343 = vunpack.c.h.b16 %v107
    %v344 = vunpack.c.l.b16 %v108
    %v345 = vunpack.c.h.b16 %v108
    %v346 = vunpack.c.l.b16 %v109
    %v347 = vunpack.c.h.b16 %v109
    %v348 = vunpack.c.l.b16 %v110
    %v349 = vunpack.c.h.b16 %v110
    %v350 = vunpack.c.l.b16 %v111
    %v351 = vunpack.c.h.b16 %v111
    %v352 = vunpack.c.l.b16 %v112
    %v353 = vunpack.c.h.b16 %v112
    %v354 = vunpack.c.l.b16 %v113
    %v355 = vunpack.c.h.b16 %v113
    %v356 = vunpack.c.l.b16 %v114
    %v357 = vunpack.c.h.b16 %v114
    %v358 = vunpack.c.l.b16 %v115
    %v359 = vunpack.c.h.b16 %v115
    %v360 = vunpack.c.l.b16 %v116
    %v361 = vunpack.c.h.b16 %v116
    %v362 = vunpack.c.l.b16 %v117
    %v363 = vunpack.c.h.b16 %v117
    %v364 = vunpack.c.l.b16 %v118
    %v365 = vunpack.c.h.b16 %v118
    %v366 = vunpack.c.l.b16 %v119
    %v367 = vunpack.c.h.b16 %v119
    %v368 = vunpack.c.l.b16 %v120
    %v369 = vunpack.c.h.b16 %v120
    %v370 = vunpack.c.l.b16 %v121
    %v371 = vunpack.c.h.b16 %v121
    %v372 = vunpack.c.l.b16 %v122
    %v373 = vunpack.c.h.b16 %v122
    %v374 = vunpack.c.l.b16 %v123
    %v375 = vunpack.c.h.b16 %v123
    %v376 = vunpack.c.l.b16 %v124
    %v377 = vunpack.c.h.b16 %v124
    %v378 = vunpack.c.l.b16 %v125
    %v379 = vunpack.c.h.b16 %v125
    %v380 = vunpack.c.l.b16 %v126
    %v381 = vunpack.c.h.b16 %v126
    %v382 = vunpack.c.l.b16 %v127
    %v383 = vunpack.c.h.b16 %v127
    %v384 = vunpack.c.l.b16 %v128
    %v385 = vunpack.c.h.b16 %v128
    %v386 = vunpack.c.l.b16 %v129
    %v387 = vunpack.c.h.b16 %v129
    %v388 = vunpack.c.l.b16 %v130
    %v389 = vunpack.c.h.b16 %v130
    %v390 = vunpack.c.l.b16 %v131
    %v391 = vunpack.c.h.b16 %v131
    %v392 = vunpack.c.l.b16 %v132
    %v393 = vunpack.c.h.b16 %v132
    %v394 = vunpack.c.l.b16 %v133
    %v395 = vunpack.c.h.b16 %v133
    %v396 = vunpack.c.l.b16 %v134
    %v397 = vunpack.c.h.b16 %v134
    %v398 = vunpack.c.l.b16 %v135
    %v399 = vunpack.c.h.b16 %v135
    %v400 = vunpack.c.l.b16 %v136
    %v401 = vunpack.c.h.b16 %v136
    %v402 = vunpack.c.l.b16 %v137
    %v403 = vunpack.c.h.b16 %v137
    %v404 = vunpack.c.l.b16 %v138
    %v405 = vunpack.c.h.b16 %v138
    %v406 = vunpack.c.l.b16 %v139
    %v407 = vunpack.c.h.b16 %v139
    %v408 = vunpack.c.l.b16 %v140
    %v409 = vunpack.c.h.b16 %v140
    %v410 = vunpack.c.l.b16 %v141
    %v411 = vunpack.c.h.b16 %v141
    %v412 = vunpack.c.l.b16 %v142
    %v413 = vunpack.c.h.b16 %v142
    %v414 = vunpack.c.l.b16 %v143
    %v415 = vunpack.c.h.b16 %v143
    %v416 = vunpack.c.l.b16 %v144
    %v417 = vunpack.c.h.b16 %v144
    %v418 = vunpack.c.l.b16 %v145
    %v419 = vunpack.c.h.b16 %v145
    %v420 = vunpack.c.l.b16 %v146
    %v421 = vunpack.c.h.b16 %v146
    %v422 = vunpack.c.l.b16 %v147
    %v423 = vunpack.c.h.b16 %v147
    %v424 = vunpack.c.l.b16 %v148
    %v425 = vunpack.c.h.b16 %v148
    %v426 = vunpack.c.l.b16 %v149
    %v427 = vunpack.c.h.b16 %v149
    %v428 = vunpack.c.l.b16 %v150
    %v429 = vunpack.c.h.b16 %v150
    %v430 = vunpack.c.l.b16 %v151
    %v431 = vunpack.c.h.b16 %v151
    %v432 = vunpack.c.l.b16 %v152
    %v433 = vunpack.c.h.b16 %v152
    %v434 = vunpack.c.l.b16 %v153
    %v435 = vunpack.c.h.b16 %v153
    %v436 = vunpack.c.l.b16 %v154
    %v437 = vunpack.c.h.b16 %v154
    %v438 = vunpack.c.l.b16 %v155
    %v439 = vunpack.c.h.b16 %v155
    %v440 = vunpack.c.l.b16 %v156
    %v441 = vunpack.c.h.b16 %v156
    %v442 = vunpack.c.l.b16 %v157
    %v443 = vunpack.c.h.b16 %v157
    %v444 = vunpack.c.l.b16 %v158
    %v445 = vunpack.c.h.b16 %v158
    %v446 = vunpack.c.l.b16 %v159
    %v447 = vunpack.c.h.b16 %v159
    %v448 = vunpack.c.l.b16 %v160
    %v449 = vunpack.c.h.b16 %v160
    %v450 = vunpack.c.l.b16 %v161
    %v451 = vunpack.c.h.b16 %v161
    %v452 = vunpack.c.l.b16 %v162
    %v453 = vunpack.c.h.b16 %v162
    %v454 = vunpack.c.l.b16 %v163
    %v455 = vunpack.c.h.b16 %v163
    %v456 = vunpack.c.l.b16 %v164
    %v457 = vunpack.c.h.b16 %v164
    %v458 = vunpack.c.l.b16 %v165
    %v459 = vunpack.c.h.b16 %v165
    %v460 = vunpack.c.l.b16 %v166
    %v461 = vunpack.c.h.b16 %v166
    %v462 = vunpack.c.l.b16 %v167
    %v463 = vunpack.c.h.b16 %v167
    %v464 = vunpack.c.l.b16 %v168
    %v465 = vunpack.c.h.b16 %v168
    %v466 = vunpack.c.l.b16 %v169
    %v467 = vunpack.c.h.b16 %v169
    %v468 = vunpack.c.l.b16 %v170
    %v469 = vunpack.c.h.b16 %v170
    %v470 = vunpack.c.l.b16 %v171
    %v471 = vunpack.c.h.b16 %v171
    %v472 = vpack.c.b16 %v278, %v276
    %v473 = vpack.c.b16 %v279, %v277
    %v474 = vpack.c.b16 %v282, %v280
    %v475 = vpack.c.b16 %v283, %v281
    %v476 = vpack.c.b16 %v286, %v284
    %v477 = vpack.c.b16 %v287, %v285
    %v478 = vpack.c.b16 %v290, %v288
    %v479 = vpack.c.b16 %v291, %v289
    %v480 = vpack.c.b16 %v294, %v292
    %v481 = vpack.c.b16 %v295, %v293
    %v482 = vpack.c.b16 %v298, %v296
    %v483 = vpack.c.b16 %v299, %v297
    %v484 = vpack.c.b16 %v302, %v300
    %v485 = vpack.c.b16 %v303, %v301
    %v486 = vpack.c.b16 %v306, %v304
    %v487 = vpack.c.b16 %v307, %v305
    %v488 = vpack.c.b16 %v310, %v308
    %v489 = vpack.c.b16 %v311, %v309
    %v490 = vpack.c.b16 %v314, %v312
    %v491 = vpack.c.b16 %v315, %v313
    %v492 = vpack.c.b16 %v318, %v316
    %v493 = vpack.c.b16 %v319, %v317
    %v494 = vpack.c.b16 %v322, %v320
    %v495 = vpack.c.b16 %v323, %v321
    %v496 = vpack.c.b16 %v326, %v324
    %v497 = vpack.c.b16 %v327, %v325
    %v498 = vpack.c.b16 %v330, %v328
    %v499 = vpack.c.b16 %v331, %v329
    %v500 = vpack.c.b16 %v334, %v332
    %v501 = vpack.c.b16 %v335, %v333
    %v502 = vpack.c.b16 %v338, %v336
    %v503 = vpack.c.b16 %v339, %v337
    %v504 = vpack.c.b16 %v342, %v340
    %v505 = vpack.c.b16 %v343, %v341
    %v506 = vpack.c.b16 %v346, %v344
    %v507 = vpack.c.b16 %v347, %v345
    %v508 = vpack.c.b16 %v350, %v348
    %v509 = vpack.c.b16 %v351, %v349
    %v510 = vpack.c.b16 %v354, %v352
    %v511 = vpack.c.b16 %v355, %v353
    %v512 = vpack.c.b16 %v358, %v356
    %v513 = vpack.c.b16 %v359, %v357
    %v514 = vpack.c.b16 %v362, %v360
    %v515 = vpack.c.b16 %v363, %v361
    %v516 = vpack.c.b16 %v366, %v364
    %v517 = vpack.c.b16 %v367, %v365
    %v518 = vpack.c.b16 %v370, %v368
    %v519 = vpack.c.b16 %v371, %v369
    %v520 = vpack.c.b16 %v374, %v372
    %v521 = vpack.c.b16 %v375, %v373
    %v522 = vpack.c.b16 %v378, %v376
    %v523 = vpack.c.b16 %v379, %v377
    %v524 = vpack.c.b16 %v382, %v380
    %v525 = vpack.c.b16 %v383, %v381
    %v526 = vpack.c.b16 %v386, %v384
    %v527 = vpack.c.b16 %v387, %v385
    %v528 = vpack.c.b16 %v390, %v388
    %v529 = vpack.c.b16 %v391, %v389
    %v530 = vpack.c.b16 %v394, %v392
    %v531 = vpack.c.b16 %v395, %v393
    %v532 = vpack.c.b16 %v398, %v396
    %v533 = vpack.c.b16 %v399, %v397
    %v534 = vpack.c.b16 %v402, %v400
    %v535 = vpack.c.b16 %v403, %v401
    %v536 = vpack.c.b16 %v406, %v404
    %v537 = vpack.c.b16 %v407, %v405
    %v538 = vpack.c.b16 %v410, %v408
    %v539 = vpack.c.b16 %v411, %v409
    %v540 = vpack.c.b16 %v414, %v412
    %v541 = vpack.c.b16 %v415, %v413
    %v542 = vpack.c.b16 %v418, %v416
    %v543 = vpack.c.b16 %v419, %v417
    %v544 = vpack.c.b16 %v422, %v420
    %v545 = vpack.c.b16 %v423, %v421
    %v546 = vpack.c.b16 %v426, %v424
    %v547 = vpack.c.b16 %v427, %v425
    %v548 = vpack.c.b16 %v430, %v428
    %v549 = vpack.c.b16 %v431, %v429
    %v550 = vpack.c.b16 %v434, %v432
    %v551 = vpack.c.b16 %v435, %v433
    %v552 = vpack.c.b16 %v438, %v436
    %v553 = vpack.c.b16 %v439, %v437
    %v554 = vpack.c.b16 %v442, %v440
    %v555 = vpack.c.b16 %v443, %v441
    %v556 = vpack.c.b16 %v446, %v444
    %v557 = vpack.c.b16 %v447, %v445
    %v558 = vpack.c.b16 %v450, %v448
    %v559 = vpack.c.b16 %v451, %v449
    %v560 = vpack.c.b16 %v454, %v452
    %v561 = vpack.c.b16 %v455, %v453
    %v562 = vpack.c.b16 %v458, %v456
    %v563 = vpack.c.b16 %v459, %v457
    %v564 = vpack.c.b16 %v462, %v460
    %v565 = vpack.c.b16 %v463, %v461
    %v566 = vpack.c.b16 %v466, %v464
    %v567 = vpack.c.b16 %v467, %v465
    %v568 = vpack.c.b16 %v470, %v468
    %v569 = vpack.c.b16 %v471, %v469
    %vm668 = vcmask 130048
    %v670 = vsel %vm668, %v73, 0
    %672 = vmatpush.bf16.msra.mxu0 %v486
    %673 = vmatpush.bf16.msra.mxu0 %v484
    %674 = vmatpush.bf16.msra.mxu0 %v482
    %675 = vmatpush.bf16.msra.mxu0 %v480
    %676 = vmatpush.bf16.msra.mxu0 %v478
    %677 = vmatpush.bf16.msra.mxu0 %v476
    %678 = vmatpush.bf16.msra.mxu0 %v474
    %679 = vmatpush.bf16.msra.mxu0 %v472
    %680 = vmatmul.bf16.gmra.mxu0 %v67
    %v681 = vpop.f32.mrf.mxu0
    %v682 = vadd.f32 %v174, %v681
    %v683 = vpop.f32.mrf.mxu0
    %684 = vdwg.mxu0
    %685 = vmatpush.bf16.msra.mxu0 %v502
    %686 = vmatpush.bf16.msra.mxu0 %v500
    %687 = vmatpush.bf16.msra.mxu0 %v498
    %688 = vmatpush.bf16.msra.mxu0 %v496
    %689 = vmatpush.bf16.msra.mxu0 %v494
    %690 = vmatpush.bf16.msra.mxu0 %v492
    %691 = vmatpush.bf16.msra.mxu0 %v490
    %692 = vmatpush.bf16.msra.mxu0 %v488
    %693 = vmatmul.bf16.gmra.mxu0 %v68
    %v694 = vpop.f32.mrf.mxu0
    %v695 = vadd.f32 %v682, %v694
    %v696 = vpop.f32.mrf.mxu0
    %697 = vdwg.mxu0
    %698 = vmatpush.bf16.msra.mxu0 %v518
    %699 = vmatpush.bf16.msra.mxu0 %v516
    %700 = vmatpush.bf16.msra.mxu0 %v514
    %701 = vmatpush.bf16.msra.mxu0 %v512
    %702 = vmatpush.bf16.msra.mxu0 %v510
    %703 = vmatpush.bf16.msra.mxu0 %v508
    %704 = vmatpush.bf16.msra.mxu0 %v506
    %705 = vmatpush.bf16.msra.mxu0 %v504
    %706 = vmatmul.bf16.gmra.mxu0 %v69
    %v707 = vpop.f32.mrf.mxu0
    %v708 = vadd.f32 %v695, %v707
    %v709 = vpop.f32.mrf.mxu0
    %710 = vdwg.mxu0
    %711 = vmatpush.bf16.msra.mxu0 %v534
    %712 = vmatpush.bf16.msra.mxu0 %v532
    %713 = vmatpush.bf16.msra.mxu0 %v530
    %714 = vmatpush.bf16.msra.mxu0 %v528
    %715 = vmatpush.bf16.msra.mxu0 %v526
    %716 = vmatpush.bf16.msra.mxu0 %v524
    %717 = vmatpush.bf16.msra.mxu0 %v522
    %718 = vmatpush.bf16.msra.mxu0 %v520
    %719 = vmatmul.bf16.gmra.mxu0 %v70
    %v720 = vpop.f32.mrf.mxu0
    %v721 = vadd.f32 %v708, %v720
    %v722 = vpop.f32.mrf.mxu0
    %723 = vdwg.mxu0
    %724 = vmatpush.bf16.msra.mxu0 %v550
    %725 = vmatpush.bf16.msra.mxu0 %v548
    %726 = vmatpush.bf16.msra.mxu0 %v546
    %727 = vmatpush.bf16.msra.mxu0 %v544
    %728 = vmatpush.bf16.msra.mxu0 %v542
    %729 = vmatpush.bf16.msra.mxu0 %v540
    %730 = vmatpush.bf16.msra.mxu0 %v538
    %731 = vmatpush.bf16.msra.mxu0 %v536
    %732 = vmatmul.bf16.gmra.mxu0 %v71
    %v733 = vpop.f32.mrf.mxu0
    %v734 = vadd.f32 %v721, %v733
    %v735 = vpop.f32.mrf.mxu0
    %736 = vdwg.mxu0
    %737 = vmatpush.bf16.msra.mxu0 %v566
    %738 = vmatpush.bf16.msra.mxu0 %v564
    %739 = vmatpush.bf16.msra.mxu0 %v562
    %740 = vmatpush.bf16.msra.mxu0 %v560
    %741 = vmatpush.bf16.msra.mxu0 %v558
    %742 = vmatpush.bf16.msra.mxu0 %v556
    %743 = vmatpush.bf16.msra.mxu0 %v554
    %744 = vmatpush.bf16.msra.mxu0 %v552
    %745 = vmatmul.bf16.gmra.mxu0 %v72
    %v746 = vpop.f32.mrf.mxu0
    %v747 = vadd.f32 %v734, %v746
    %v748 = vpop.f32.mrf.mxu0
    %749 = vdwg.mxu0
    %750 = vmatpush.bf16.msra.mxu0 0
    %751 = vmatpush.bf16.msra.mxu0 0
    %752 = vmatpush.bf16.msra.mxu0 0
    %753 = vmatpush.bf16.msra.mxu0 0
    %754 = vmatpush.bf16.msra.mxu0 0
    %755 = vmatpush.bf16.msra.mxu0 0
    %756 = vmatpush.bf16.msra.mxu0 0
    %757 = vmatpush.bf16.msra.mxu0 %v568
    %758 = vmatmul.bf16.gmra.mxu0 %v670
    %v759 = vpop.f32.mrf.mxu0
    %v760 = vadd.f32 %v747, %v759
    %v761 = vpop.f32.mrf.mxu0
    %762 = vdwg.mxu0
    %763 = vmatpush.bf16.msra.mxu0 %v487
    %764 = vmatpush.bf16.msra.mxu0 %v485
    %765 = vmatpush.bf16.msra.mxu0 %v483
    %766 = vmatpush.bf16.msra.mxu0 %v481
    %767 = vmatpush.bf16.msra.mxu0 %v479
    %768 = vmatpush.bf16.msra.mxu0 %v477
    %769 = vmatpush.bf16.msra.mxu0 %v475
    %770 = vmatpush.bf16.msra.mxu0 %v473
    %771 = vmatmul.bf16.gmra.mxu0 %v67
    %v772 = vpop.f32.mrf.mxu0
    %v773 = vadd.f32 %v175, %v772
    %v774 = vpop.f32.mrf.mxu0
    %775 = vdwg.mxu0
    %776 = vmatpush.bf16.msra.mxu0 %v503
    %777 = vmatpush.bf16.msra.mxu0 %v501
    %778 = vmatpush.bf16.msra.mxu0 %v499
    %779 = vmatpush.bf16.msra.mxu0 %v497
    %780 = vmatpush.bf16.msra.mxu0 %v495
    %781 = vmatpush.bf16.msra.mxu0 %v493
    %782 = vmatpush.bf16.msra.mxu0 %v491
    %783 = vmatpush.bf16.msra.mxu0 %v489
    %784 = vmatmul.bf16.gmra.mxu0 %v68
    %v785 = vpop.f32.mrf.mxu0
    %v786 = vadd.f32 %v773, %v785
    %v787 = vpop.f32.mrf.mxu0
    %788 = vdwg.mxu0
    %789 = vmatpush.bf16.msra.mxu0 %v519
    %790 = vmatpush.bf16.msra.mxu0 %v517
    %791 = vmatpush.bf16.msra.mxu0 %v515
    %792 = vmatpush.bf16.msra.mxu0 %v513
    %793 = vmatpush.bf16.msra.mxu0 %v511
    %794 = vmatpush.bf16.msra.mxu0 %v509
    %795 = vmatpush.bf16.msra.mxu0 %v507
    %796 = vmatpush.bf16.msra.mxu0 %v505
    %797 = vmatmul.bf16.gmra.mxu0 %v69
    %v798 = vpop.f32.mrf.mxu0
    %v799 = vadd.f32 %v786, %v798
    %v800 = vpop.f32.mrf.mxu0
    %801 = vdwg.mxu0
    %802 = vmatpush.bf16.msra.mxu0 %v535
    %803 = vmatpush.bf16.msra.mxu0 %v533
    %804 = vmatpush.bf16.msra.mxu0 %v531
    %805 = vmatpush.bf16.msra.mxu0 %v529
    %806 = vmatpush.bf16.msra.mxu0 %v527
    %807 = vmatpush.bf16.msra.mxu0 %v525
    %808 = vmatpush.bf16.msra.mxu0 %v523
    %809 = vmatpush.bf16.msra.mxu0 %v521
    %810 = vmatmul.bf16.gmra.mxu0 %v70
    %v811 = vpop.f32.mrf.mxu0
    %v812 = vadd.f32 %v799, %v811
    %v813 = vpop.f32.mrf.mxu0
    %814 = vdwg.mxu0
    %815 = vmatpush.bf16.msra.mxu0 %v551
    %816 = vmatpush.bf16.msra.mxu0 %v549
    %817 = vmatpush.bf16.msra.mxu0 %v547
    %818 = vmatpush.bf16.msra.mxu0 %v545
    %819 = vmatpush.bf16.msra.mxu0 %v543
    %820 = vmatpush.bf16.msra.mxu0 %v541
    %821 = vmatpush.bf16.msra.mxu0 %v539
    %822 = vmatpush.bf16.msra.mxu0 %v537
    %823 = vmatmul.bf16.gmra.mxu0 %v71
    %v824 = vpop.f32.mrf.mxu0
    %v825 = vadd.f32 %v812, %v824
    %v826 = vpop.f32.mrf.mxu0
    %827 = vdwg.mxu0
    %828 = vmatpush.bf16.msra.mxu0 %v567
    %829 = vmatpush.bf16.msra.mxu0 %v565
    %830 = vmatpush.bf16.msra.mxu0 %v563
    %831 = vmatpush.bf16.msra.mxu0 %v561
    %832 = vmatpush.bf16.msra.mxu0 %v559
    %833 = vmatpush.bf16.msra.mxu0 %v557
    %834 = vmatpush.bf16.msra.mxu0 %v555
    %835 = vmatpush.bf16.msra.mxu0 %v553
    %836 = vmatmul.bf16.gmra.mxu0 %v72
    %v837 = vpop.f32.mrf.mxu0
    %v838 = vadd.f32 %v825, %v837
    %v839 = vpop.f32.mrf.mxu0
    %840 = vdwg.mxu0
    %841 = vmatpush.bf16.msra.mxu0 0
    %842 = vmatpush.bf16.msra.mxu0 0
    %843 = vmatpush.bf16.msra.mxu0 0
    %844 = vmatpush.bf16.msra.mxu0 0
    %845 = vmatpush.bf16.msra.mxu0 0
    %846 = vmatpush.bf16.msra.mxu0 0
    %847 = vmatpush.bf16.msra.mxu0 0
    %848 = vmatpush.bf16.msra.mxu0 %v569
    %849 = vmatmul.bf16.gmra.mxu0 %v670
    %v850 = vpop.f32.mrf.mxu0
    %v851 = vadd.f32 %v838, %v850
    %v852 = vpop.f32.mrf.mxu0
    %853 = vdwg.mxu0
    %v854 = vmax.f32 %v760, 0.0
    %v855 = vmax.f32 %v851, 0.0
    %v856 = vpack.c.bf16 %v854, %v854
    %v857 = vpack.c.bf16 %v855, %v855
    %v858 = vld [vmem:[#allocation2] sm:$0xf]
    %v859 = vld [vmem:[#allocation2 + $0x4] sm:$0xf]
    %v860 = vld [vmem:[#allocation2 + $0x8] sm:$0xf]
    %v861 = vld [vmem:[#allocation2 + $0xc] sm:$0xf]
    %v862 = vld [vmem:[#allocation2 + $0x10] sm:$0xf]
    %v863 = vld [vmem:[#allocation2 + $0x14] sm:$0xf]
    %v864 = vld [vmem:[#allocation2 + $0x18] sm:$0xf]
    %v865 = vld [vmem:[#allocation2 + $0x1c] sm:$0xf]
    %v866 = vld [vmem:[#allocation2 + $0x20] sm:$0xf]
    %v867 = vld [vmem:[#allocation2 + $0x24] sm:$0xf]
    %v868 = vld [vmem:[#allocation2 + $0x28] sm:$0xf]
    %v869 = vld [vmem:[#allocation2 + $0x2c] sm:$0xf]
    %v870 = vld [vmem:[#allocation2 + $0x30] sm:$0xf]
    %v871 = vld [vmem:[#allocation2 + $0x34] sm:$0xf]
    %v872 = vld [vmem:[#allocation2 + $0x38] sm:$0xf]
    %v873 = vld [vmem:[#allocation2 + $0x3c] sm:$0xf]
    %v874 = vld [vmem:[#allocation2 + $0x40] sm:$0xf]
    %v875 = vld [vmem:[#allocation2 + $0x44] sm:$0xf]
    %v876 = vld [vmem:[#allocation2 + $0x48] sm:$0xf]
    %v877 = vld [vmem:[#allocation2 + $0x4c] sm:$0xf]
    %v878 = vld [vmem:[#allocation2 + $0x50] sm:$0xf]
    %v879 = vld [vmem:[#allocation2 + $0x54] sm:$0xf]
    %v880 = vld [vmem:[#allocation2 + $0x58] sm:$0xf]
    %v881 = vld [vmem:[#allocation2 + $0x5c] sm:$0xf]
    %v882 = vld [vmem:[#allocation2 + $0x60] sm:$0xf]
    %v883 = vld [vmem:[#allocation2 + $0x64] sm:$0xf]
    %v884 = vld [vmem:[#allocation2 + $0x68] sm:$0xf]
    %v885 = vld [vmem:[#allocation2 + $0x6c] sm:$0xf]
    %v886 = vld [vmem:[#allocation2 + $0x70] sm:$0xf]
    %v887 = vld [vmem:[#allocation2 + $0x74] sm:$0xf]
    %v888 = vld [vmem:[#allocation2 + $0x78] sm:$0xf]
    %v889 = vld [vmem:[#allocation2 + $0x7c] sm:$0xf]
    %v890 = vld [vmem:[%s4] sm:$0x1]
    %v892 = vperm.slane %v890, 0
    %v926 = vunpack.c.l.b16 %v858
    %v927 = vunpack.c.l.b16 %v859
    %v928 = vunpack.c.l.b16 %v860
    %v929 = vunpack.c.l.b16 %v861
    %v930 = vunpack.c.l.b16 %v862
    %v931 = vunpack.c.l.b16 %v863
    %v932 = vunpack.c.l.b16 %v864
    %v933 = vunpack.c.l.b16 %v865
    %v934 = vunpack.c.l.b16 %v866
    %v935 = vunpack.c.l.b16 %v867
    %v936 = vunpack.c.l.b16 %v868
    %v937 = vunpack.c.l.b16 %v869
    %v938 = vunpack.c.l.b16 %v870
    %v939 = vunpack.c.l.b16 %v871
    %v940 = vunpack.c.l.b16 %v872
    %v941 = vunpack.c.l.b16 %v873
    %v942 = vunpack.c.l.b16 %v874
    %v943 = vunpack.c.l.b16 %v875
    %v944 = vunpack.c.l.b16 %v876
    %v945 = vunpack.c.l.b16 %v877
    %v946 = vunpack.c.l.b16 %v878
    %v947 = vunpack.c.l.b16 %v879
    %v948 = vunpack.c.l.b16 %v880
    %v949 = vunpack.c.l.b16 %v881
    %v950 = vunpack.c.l.b16 %v882
    %v951 = vunpack.c.l.b16 %v883
    %v952 = vunpack.c.l.b16 %v884
    %v953 = vunpack.c.l.b16 %v885
    %v954 = vunpack.c.l.b16 %v886
    %v955 = vunpack.c.l.b16 %v887
    %v956 = vunpack.c.l.b16 %v888
    %v957 = vunpack.c.l.b16 %v889
    %v958 = vpack.c.b16 %v927, %v926
    %v959 = vpack.c.b16 %v929, %v928
    %v960 = vpack.c.b16 %v931, %v930
    %v961 = vpack.c.b16 %v933, %v932
    %v962 = vpack.c.b16 %v935, %v934
    %v963 = vpack.c.b16 %v937, %v936
    %v964 = vpack.c.b16 %v939, %v938
    %v965 = vpack.c.b16 %v941, %v940
    %v966 = vpack.c.b16 %v943, %v942
    %v967 = vpack.c.b16 %v945, %v944
    %v968 = vpack.c.b16 %v947, %v946
    %v969 = vpack.c.b16 %v949, %v948
    %v970 = vpack.c.b16 %v951, %v950
    %v971 = vpack.c.b16 %v953, %v952
    %v972 = vpack.c.b16 %v955, %v954
    %v973 = vpack.c.b16 %v957, %v956
    %990 = vmatpush.bf16.msra.mxu0 %v965
    %991 = vmatpush.bf16.msra.mxu0 %v964
    %992 = vmatpush.bf16.msra.mxu0 %v963
    %993 = vmatpush.bf16.msra.mxu0 %v962
    %994 = vmatpush.bf16.msra.mxu0 %v961
    %995 = vmatpush.bf16.msra.mxu0 %v960
    %996 = vmatpush.bf16.msra.mxu0 %v959
    %997 = vmatpush.bf16.msra.mxu0 %v958
    %998 = vmatmul.bf16.gmra.mxu0 %v856
    %v999 = vpop.f32.mrf.mxu0
    %v1000 = vadd.f32 %v892, %v999
    %v1001 = vpop.f32.mrf.mxu0
    %1002 = vdwg.mxu0
    %1003 = vmatpush.bf16.msra.mxu0 %v973
    %1004 = vmatpush.bf16.msra.mxu0 %v972
    %1005 = vmatpush.bf16.msra.mxu0 %v971
    %1006 = vmatpush.bf16.msra.mxu0 %v970
    %1007 = vmatpush.bf16.msra.mxu0 %v969
    %1008 = vmatpush.bf16.msra.mxu0 %v968
    %1009 = vmatpush.bf16.msra.mxu0 %v967
    %1010 = vmatpush.bf16.msra.mxu0 %v966
    %1011 = vmatmul.bf16.gmra.mxu0 %v857
    %v1012 = vpop.f32.mrf.mxu0
    %v1013 = vadd.f32 %v1000, %v1012
    %v1014 = vpop.f32.mrf.mxu0
    %1015 = vdwg.mxu0
    %v1016 = vmax.f32 %v1013, 0.0
    %v1017 = vpack.c.bf16 %v1016, %v1016
    %v1018 = vld [vmem:[#allocation5] sm:$0xf]
    %v1019 = vld [vmem:[#allocation5 + $0x4] sm:$0xf]
    %v1020 = vld [vmem:[#allocation5 + $0x8] sm:$0xf]
    %v1021 = vld [vmem:[#allocation5 + $0xc] sm:$0xf]
    %v1022 = vld [vmem:[#allocation5 + $0x10] sm:$0xf]
    %v1023 = vld [vmem:[#allocation5 + $0x14] sm:$0xf]
    %v1024 = vld [vmem:[#allocation5 + $0x18] sm:$0xf]
    %v1025 = vld [vmem:[#allocation5 + $0x1c] sm:$0xf]
    %v1026 = vld [vmem:[#allocation5 + $0x20] sm:$0xf]
    %v1027 = vld [vmem:[#allocation5 + $0x24] sm:$0xf]
    %v1028 = vld [vmem:[#allocation5 + $0x28] sm:$0xf]
    %v1029 = vld [vmem:[#allocation5 + $0x2c] sm:$0xf]
    %v1030 = vld [vmem:[#allocation5 + $0x30] sm:$0xf]
    %v1031 = vld [vmem:[#allocation5 + $0x34] sm:$0xf]
    %v1032 = vld [vmem:[#allocation5 + $0x38] sm:$0xf]
    %v1033 = vld [vmem:[#allocation5 + $0x3c] sm:$0xf]
    %v1034 = vld [vmem:[%s6] sm:$0x1]
    %v1036 = vperm.slane %v1034, 0
    %v1054 = vunpack.c.l.b16 %v1018
    %v1055 = vunpack.c.l.b16 %v1019
    %v1056 = vunpack.c.l.b16 %v1020
    %v1057 = vunpack.c.l.b16 %v1021
    %v1058 = vunpack.c.l.b16 %v1022
    %v1059 = vunpack.c.l.b16 %v1023
    %v1060 = vunpack.c.l.b16 %v1024
    %v1061 = vunpack.c.l.b16 %v1025
    %v1062 = vunpack.c.l.b16 %v1026
    %v1063 = vunpack.c.l.b16 %v1027
    %v1064 = vunpack.c.l.b16 %v1028
    %v1065 = vunpack.c.l.b16 %v1029
    %v1066 = vunpack.c.l.b16 %v1030
    %v1067 = vunpack.c.l.b16 %v1031
    %v1068 = vunpack.c.l.b16 %v1032
    %v1069 = vunpack.c.l.b16 %v1033
    %v1070 = vpack.c.b16 %v1055, %v1054
    %v1071 = vpack.c.b16 %v1057, %v1056
    %v1072 = vpack.c.b16 %v1059, %v1058
    %v1073 = vpack.c.b16 %v1061, %v1060
    %v1074 = vpack.c.b16 %v1063, %v1062
    %v1075 = vpack.c.b16 %v1065, %v1064
    %v1076 = vpack.c.b16 %v1067, %v1066
    %v1077 = vpack.c.b16 %v1069, %v1068
    %1086 = vmatpush.bf16.msra.mxu0 %v1077
    %1087 = vmatpush.bf16.msra.mxu0 %v1076
    %1088 = vmatpush.bf16.msra.mxu0 %v1075
    %1089 = vmatpush.bf16.msra.mxu0 %v1074
    %1090 = vmatpush.bf16.msra.mxu0 %v1073
    %1091 = vmatpush.bf16.msra.mxu0 %v1072
    %1092 = vmatpush.bf16.msra.mxu0 %v1071
    %1093 = vmatpush.bf16.msra.mxu0 %v1070
    %1094 = vmatmul.bf16.gmra.mxu0 %v1017
    %v1095 = vpop.f32.mrf.mxu0
    %v1096 = vadd.f32 %v1036, %v1095
    %v1097 = vpop.f32.mrf.mxu0
    %1098 = vdwg.mxu0
    %1099 = vst [vmem:[#allocation7] sm:$0xff] %v1096
    // Predicated region
    $region38: #{net_forward.1} parent=1 // pred_check
      _
    $region39: #{net_forward.1} parent=1 // pred_check_branch
      %1101 = sbr.rel (0) target = $region41
    $region40: #{net_forward.1} parent=1 // pred_region
      %1103 = vsyncadd [#allocation4], 0
      %s1105 = sshll.u32 [#allocation7], 4
      %s1106 = int_to_ptr.vmem [resolvable:$true] %s1105
      %s1107 = sshll.u32 %s7, 4
      %s1108 = int_to_ptr.hbm [resolvable:$true] %s1107
      %1110 = dma.vmem_to_hbm [thread:$0]  %s1106, 128, %s1108, [#allocation4]
    $region41: #{net_forward.1} parent=1 // pred_fallthru
      _
    // Predicated region
    $region42: #{net_forward.1} parent=1 // pred_check
      _
    $region43: #{net_forward.1} parent=1 // pred_check_branch
      %1112 = sbr.rel (0) target = $region45
    $region44: #{net_forward.1} parent=1 // pred_region
      %1114 = dma.done [#allocation4], 128
    $region45: #{net_forward.1} parent=1 // pred_fallthru
      _
    %1115 = vsyncpa [#allocation3], 1
    %1116 = vsyncpa [#allocation6], 1
    %1117 = vsyncpa [#allocation4], 1

</llo_original>
